<compile_context>
chip_gen: v7x
topology: tpu7x:2x2x1
jax: 0.10.0
libtpu: 0.0.40
codegen_flags: <defaults>
</compile_context>

<pallas_src>
import functools

import jax
import jax.numpy as jnp
from jax import lax
from jax.experimental import pallas as pl
from jax.experimental.pallas import tpu as pltpu

BLOCK_SIZE = 256
DROPOUT = 0.2   # TODO(synk): nn.Dropout(0.2) is identity here (eval mode); training-mode
                # dropout would use pltpu.prng_seed + pltpu.prng_random_bits on the probs.
N_EMBD = 140


def _round_up(v, m):
    return ((v + m - 1) // m) * m


def _pick_bb(B, T, target_m=256):
    """Batch elements per grid step.

    Collapse to a single grid step whenever the whole problem cannot even fill the
    MXU's M dimension (per-step overhead dominates sub-microsecond steps); otherwise
    pick the smallest divisor of B with Bb*T >= target_m so every step has real MXU
    work and the remaining "parallel" steps are worth sharding across v7x's two TCs.
    """
    if B * T <= target_m:
        return B
    for bb in range(1, B + 1):
        if B % bb == 0 and bb * T >= target_m:
            return bb
    return B


def _vmem_bytes_estimate(Bb, T, C, Hpad):
    """Rough per-step VMEM footprint (blocks double-buffered + live intermediates)."""
    blk_x = 2 * Bb * T * C * 4            # f32 input block, double-buffered
    w = 2 * C * 3 * Hpad * 2              # bf16 fused weights (conservatively x2)
    blk_o = 2 * Bb * T * Hpad * 2         # bf16 output block, double-buffered
    kqv = Bb * T * 3 * Hpad * 4           # f32 projection result
    kqv_bf = Bb * T * 3 * Hpad * 2        # bf16 k/q/v copies
    scores = 3 * Bb * T * T * 4           # scores / exp / probs in f32
    out_acc = Bb * T * Hpad * 4           # f32 attention output before cast
    return blk_x + w + blk_o + kqv + kqv_bf + scores + out_acc


def fuse_head_weights(w_key, w_query, w_value):
    """Init-time (call ONCE): fused bf16 projection weight (C, 3*Hpad) = [Wk | s*Wq | Wv].

    w_* are PyTorch-style nn.Linear weights of shape (head_size, C).  The attention
    scale 1/sqrt(head_size) is folded into the query columns so it costs nothing
    inside the kernel.
    """
    H, C = w_key.shape
    Hpad = _round_up(max(H, 128), 128)
    scale = jnp.float32(H) ** -0.5

    def pad_w(w_t):  # (C, H) -> (C, Hpad), zero-padded head columns
        return jnp.pad(jnp.asarray(w_t, jnp.float32), ((0, 0), (0, Hpad - H)))

    w_fused = jnp.concatenate(
        [pad_w(w_key.T), pad_w(w_query.T) * scale, pad_w(w_value.T)],
        axis=1).astype(jnp.bfloat16)                                   # (C, 3*Hpad)
    return w_fused


def head_kernel(x_ref, w_ref, o_ref):
    Bb, T, C = x_ref.shape
    Hp3 = w_ref.shape[1]
    Hp = Hp3 // 3

    # Fused K|Q|V projection: one (Bb*T, C) @ (C, 3*Hpad) MXU matmul.
    # x is cast to bf16 in VMEM; C=140 (full array dim) is handled directly by the
    # matmul lowering -- no padded HBM copy of x is ever materialized.
    x2d = x_ref[...].astype(jnp.bfloat16).reshape(Bb * T, C)
    kqv = jnp.dot(x2d, w_ref[...], preferred_element_type=jnp.float32)
    kqv = kqv.reshape(Bb, T, Hp3)

    # Lane-aligned (multiples of 128) slices; the 1/sqrt(H) scale is already folded
    # into the query weight columns.
    k = kqv[:, :, 0 * Hp:1 * Hp].astype(jnp.bfloat16)
    q = kqv[:, :, 1 * Hp:2 * Hp].astype(jnp.bfloat16)
    v = kqv[:, :, 2 * Hp:3 * Hp].astype(jnp.bfloat16)

    # Scores: contract over the head axis directly (no explicit k.T relayout).
    s = jnp.einsum('bqh,bkh->bqk', q, k,
                   preferred_element_type=jnp.float32)                # (Bb, T, T) f32

    # Causal mask; the diagonal is always kept so the row max is finite and denom >= 1.
    row = lax.broadcasted_iota(jnp.int32, (T, T), 0)
    col = lax.broadcasted_iota(jnp.int32, (T, T), 1)
    s = jnp.where((col <= row)[None, :, :], s, -jnp.inf)

    # Numerically stable softmax in f32 (keep f32 on all generations; v5e has no bf16
    # VPU/EUP); EUP reciprocal instead of a (T,T) divide.
    m = jnp.max(s, axis=-1, keepdims=True)
    e = jnp.exp(s - m)
    denom = jnp.sum(e, axis=-1, keepdims=True)
    p = e * pl.reciprocal(denom, approx=True)

    # TODO(synk): nn.Dropout(DROPOUT) skipped (eval-mode identity).

    out = jnp.einsum('bqk,bkh->bqh', p.astype(jnp.bfloat16), v,
                     preferred_element_type=jnp.float32)              # (Bb, T, Hpad)
    o_ref[...] = out.astype(o_ref.dtype)                              # lane-dense bf16 store


@functools.partial(jax.jit, static_argnames="head_size")
def head_forward(x, w_fused, head_size):
    """x: (B, T, C) float32 (unpadded); w_fused: (C, 3*Hpad) bf16 from fuse_head_weights."""
    B, T, C = x.shape
    Hpad = w_fused.shape[1] // 3
    assert w_fused.shape[0] == C
    Bb = _pick_bb(B, T)

    # Generation-aware VMEM re-budget: only emit an explicit limit when the estimate
    # exceeds the smallest scoped default (v5e 16 MiB); cap well below v7x's 64 MiB phys.
    compiler_kwargs = dict(dimension_semantics=("parallel",))
    vmem_est = _vmem_bytes_estimate(Bb, T, C, Hpad)
    if vmem_est > 12 * 1024 * 1024:
        compiler_kwargs["vmem_limit_bytes"] = min(2 * vmem_est, 48 * 1024 * 1024)

    out_padded = pl.pallas_call(
        head_kernel,
        out_shape=jax.ShapeDtypeStruct((B, T, Hpad), jnp.bfloat16),
        grid=(B // Bb,),
        in_specs=[
            pl.BlockSpec((Bb, T, C), lambda b: (b, 0, 0)),        # full (non-aligned) C dim
            pl.BlockSpec((C, 3 * Hpad), lambda b: (0, 0)),        # fused weights, resident
        ],
        out_specs=pl.BlockSpec((Bb, T, Hpad), lambda b: (b, 0, 0)),
        compiler_params=pltpu.CompilerParams(**compiler_kwargs),
    )(x, w_fused)

    # Drop the lane-padding head columns; return f32 like the PyTorch module
    # (slice + cast fuse into a single small XLA op under jit).
    return out_padded[:, :, :head_size].astype(jnp.float32)


def head_reference(x, w_key, w_query, w_value):
    k = x @ w_key.T
    q = x @ w_query.T
    v = x @ w_value.T
    wei = (q @ jnp.swapaxes(k, -2, -1)) * (k.shape[-1] ** -0.5)
    T = x.shape[1]
    mask = jnp.tril(jnp.ones((T, T), bool))
    wei = jnp.where(mask, wei, -jnp.inf)
    wei = jax.nn.softmax(wei, axis=-1)
    return wei @ v


if __name__ == "__main__":
    B, T, C = 2, 8, N_EMBD
    head_size = 32
    assert T <= BLOCK_SIZE

    key = jax.random.PRNGKey(0)
    kx, kk, kq, kv = jax.random.split(key, 4)
    x = jax.random.normal(kx, (B, T, C), dtype=jnp.float32)
    bound = 1.0 / (C ** 0.5)
    w_key = jax.random.uniform(kk, (head_size, C), jnp.float32, -bound, bound)
    w_query = jax.random.uniform(kq, (head_size, C), jnp.float32, -bound, bound)
    w_value = jax.random.uniform(kv, (head_size, C), jnp.float32, -bound, bound)

    # Init-time weight fusion (hoisted out of the per-call path).
    w_fused = jax.block_until_ready(fuse_head_weights(w_key, w_query, w_value))

    out = head_forward(x, w_fused, head_size)
    out = jax.block_until_ready(out)

    ref = head_reference(x, w_key, w_query, w_value)
    assert out.shape == (B, T, head_size)
    # bf16 matmul inputs (f32 accumulation) + bf16 output store -> compare against the
    # f32 reference with a tolerance covering bf16 rounding.
    assert jnp.allclose(out, ref, atol=3e-2, rtol=3e-2), \
        f"max abs err {jnp.max(jnp.abs(out - ref))}"

    print("KERNEL_OK")
</pallas_src>

<mosaic_0001>
module attributes {stable_mosaic.version = 11 : i64} {
  func.func @head_kernel(%arg0: i32, %arg1: memref<2x8x140xf32, #tpu.memory_space<vmem>>, %arg2: memref<140x384xbf16, #tpu.memory_space<vmem>>, %arg3: memref<2x8x128xbf16, #tpu.memory_space<vmem>>) attributes {dimension_semantics = [#tpu.dimension_semantics<parallel>], iteration_bounds = array<i64: 1>, scalar_prefetch = 0 : i64, scratch_operands = 0 : i64, tpu.core_type = #tpu.core_type<tc>, window_params = [{transform_indices = @transform_0, window_bounds = array<i64: 2, 8, 140>}, {pipeline_mode = #tpu.pipeline_mode<synchronous>, transform_indices = @transform_1, window_bounds = array<i64: 140, 384>}, {transform_indices = @transform_2, window_bounds = array<i64: 2, 8, 128>}]} {
    %c0 = arith.constant 0 : index
    %c0_0 = arith.constant 0 : index
    %c0_1 = arith.constant 0 : index
    %0 = vector.load %arg1[%c0, %c0_0, %c0_1] : memref<2x8x140xf32, #tpu.memory_space<vmem>>, vector<2x8x140xf32>
    %1 = arith.truncf %0 : vector<2x8x140xf32> to vector<2x8x140xbf16>
    %2 = vector.shape_cast %1 : vector<2x8x140xbf16> to vector<16x140xbf16>
    %c0_2 = arith.constant 0 : index
    %c0_3 = arith.constant 0 : index
    %3 = vector.load %arg2[%c0_2, %c0_3] : memref<140x384xbf16, #tpu.memory_space<vmem>>, vector<140x384xbf16>
    %cst = arith.constant dense<0.000000e+00> : vector<16x384xf32>
    %4 = tpu.matmul %2, %3, %cst {dimension_numbers = #tpu.dot_dimension_numbers<[1], [0], [0], [1], [0, 0, 1, 1], [], []>} : vector<16x140xbf16>, vector<140x384xbf16>, vector<16x384xf32> -> vector<16x384xf32>
    %5 = vector.shape_cast %4 : vector<16x384xf32> to vector<2x8x384xf32>
    %6 = vector.extract_strided_slice %5 {offsets = [0, 0, 0], sizes = [2, 8, 128], strides = [1, 1, 1]} : vector<2x8x384xf32> to vector<2x8x128xf32>
    %7 = arith.truncf %6 : vector<2x8x128xf32> to vector<2x8x128xbf16>
    %8 = vector.extract_strided_slice %5 {offsets = [0, 0, 128], sizes = [2, 8, 128], strides = [1, 1, 1]} : vector<2x8x384xf32> to vector<2x8x128xf32>
    %9 = arith.truncf %8 : vector<2x8x128xf32> to vector<2x8x128xbf16>
    %10 = vector.extract_strided_slice %5 {offsets = [0, 0, 256], sizes = [2, 8, 128], strides = [1, 1, 1]} : vector<2x8x384xf32> to vector<2x8x128xf32>
    %11 = arith.truncf %10 : vector<2x8x128xf32> to vector<2x8x128xbf16>
    "tpu.trace_start"() <{level = 10 : i32, message = "bqh,bkh->bqk"}> : () -> ()
    %cst_4 = arith.constant dense<0.000000e+00> : vector<2x8x8xf32>
    %12 = tpu.matmul %9, %7, %cst_4 {dimension_numbers = #tpu.dot_dimension_numbers<[2], [2], [1], [1], [0, 0, 0, 1, 1, 1], [0], [0]>} : vector<2x8x128xbf16>, vector<2x8x128xbf16>, vector<2x8x8xf32> -> vector<2x8x8xf32>
    "tpu.trace_stop"() : () -> ()
    %13 = tpu.iota {dimensions = array<i32: 0>} : vector<8x8xi32>
    %14 = tpu.iota {dimensions = array<i32: 1>} : vector<8x8xi32>
    %15 = arith.cmpi sle, %14, %13 : vector<8x8xi32>
    %16 = vector.shape_cast %15 : vector<8x8xi1> to vector<1x8x8xi1>
    %cst_5 = arith.constant 0xFF800000 : f32
    %17 = vector.shape_cast %16 : vector<1x8x8xi1> to vector<1x8x8xi1>
    %18 = vector.broadcast %17 : vector<1x8x8xi1> to vector<2x8x8xi1>
    %19 = vector.broadcast %cst_5 : f32 to vector<2x8x8xf32>
    %20 = arith.select %18, %12, %19 : vector<2x8x8xi1>, vector<2x8x8xf32>
    %cst_6 = arith.constant dense<0xFF800000> : vector<2x8xf32>
    %21 = vector.multi_reduction <maximumf>, %20, %cst_6 [2] : vector<2x8x8xf32> to vector<2x8xf32>
    %22 = vector.shape_cast %21 : vector<2x8xf32> to vector<2x8x1xf32>
    %23 = vector.broadcast %22 : vector<2x8x1xf32> to vector<2x8x8xf32>
    %24 = arith.subf %20, %23 : vector<2x8x8xf32>
    %25 = math.exp %24 : vector<2x8x8xf32>
    %cst_7 = arith.constant dense<0.000000e+00> : vector<2x8xf32>
    %26 = vector.multi_reduction <add>, %25, %cst_7 [2] : vector<2x8x8xf32> to vector<2x8xf32>
    %27 = vector.shape_cast %26 : vector<2x8xf32> to vector<2x8x1xf32>
    %28 = tpu.reciprocal %27 {approx = true} : vector<2x8x1xf32> -> vector<2x8x1xf32>
    %29 = vector.broadcast %28 : vector<2x8x1xf32> to vector<2x8x8xf32>
    %30 = arith.mulf %25, %29 : vector<2x8x8xf32>
    %31 = arith.truncf %30 : vector<2x8x8xf32> to vector<2x8x8xbf16>
    "tpu.trace_start"() <{level = 10 : i32, message = "bqk,bkh->bqh"}> : () -> ()
    %cst_8 = arith.constant dense<0.000000e+00> : vector<2x8x128xf32>
    %32 = tpu.matmul %31, %11, %cst_8 {dimension_numbers = #tpu.dot_dimension_numbers<[2], [1], [1], [2], [0, 0, 0, 1, 1, 2], [0], [0]>} : vector<2x8x8xbf16>, vector<2x8x128xbf16>, vector<2x8x128xf32> -> vector<2x8x128xf32>
    "tpu.trace_stop"() : () -> ()
    %33 = arith.truncf %32 : vector<2x8x128xf32> to vector<2x8x128xbf16>
    %c0_9 = arith.constant 0 : index
    %c0_10 = arith.constant 0 : index
    %c0_11 = arith.constant 0 : index
    %34 = vector.load %arg3[%c0_9, %c0_10, %c0_11] : memref<2x8x128xbf16, #tpu.memory_space<vmem>>, vector<2x8x128xbf16>
    tpu.vector_store %arg3[%c0_9, %c0_10, %c0_11], %33 {strides = array<i32>} : memref<2x8x128xbf16, #tpu.memory_space<vmem>>, vector<2x8x128xbf16>,
    return
  }
  func.func @transform_0(%arg0: i32) -> (i32, i32, i32) {
    %c0_i32 = arith.constant 0 : i32
    %c0_i32_0 = arith.constant 0 : i32
    %c0_i32_1 = arith.constant 0 : i32
    return %arg0, %c0_i32, %c0_i32_0 : i32, i32, i32
  }
  func.func @transform_1(%arg0: i32) -> (i32, i32) {
    %c0_i32 = arith.constant 0 : i32
    %c0_i32_0 = arith.constant 0 : i32
    %c0_i32_1 = arith.constant 0 : i32
    return %c0_i32, %c0_i32_0 : i32, i32
  }
  func.func @transform_2(%arg0: i32) -> (i32, i32, i32) {
    %c0_i32 = arith.constant 0 : i32
    %c0_i32_0 = arith.constant 0 : i32
    %c0_i32_1 = arith.constant 0 : i32
    return %arg0, %c0_i32, %c0_i32_0 : i32, i32, i32
  }
}

</mosaic_0001>

<llo_original>
// kernel: head_forward.1
$region0: #{head_forward.1}
  #allocation0 [shape = 'u32[]', space=smem, size = 0x4, offset = 0x4, fixed_abs, tag = 'smem constant byte address 0x4 - core index']
  #allocation1 [shape = 'u32[144,128]{1,0:T(1,128)}', space=vmem, size = 0x12000, scoped, tag = 'internal scratch']
  %s0 = inlined_call_operand.hbm [shape: f32[2,8,140], index: 0, kind: input, shape index: {}]
  %s1 = inlined_call_operand.hbm [shape: bf16[140,384], index: 1, kind: input, shape index: {}]
  %s2 = inlined_call_operand.vmem [shape: bf16[2,8,128], index: 2, kind: output, shape index: {}]
  %s3 = sld [smem:[#allocation0]]
  $region26: #{head_forward.1} parent=0
    _
  %s5 = ssub.s32 1, %s3
  %s6 = scalar_select 0, %s5, %s3
  $region1: #{head_forward.1} parent=0
    #allocation2 [shape = 'u8[16384]{0}', space=vmem, size = 0x4000, scoped, tag = 'input window, operand 0, single buffered']
    #allocation3 [shape = 's32[1]{0}', space=sflag, size = 0x4, scoped, tag = 'scoped memory for head_forward.1']
    #allocation4 [shape = 'u8[110592]{0}', space=vmem, size = 0x1b000, scoped, tag = 'input window, operand 1, single buffered']
    #allocation5 [shape = 's32[1]{0}', space=sflag, size = 0x4, scoped, tag = 'scoped memory for head_forward.1']
    %7 = vsyncpa [#allocation3], 0
    %8 = vsyncpa [#allocation5], 0
    // Predicated region
    $region2: #{head_forward.1} parent=1 // pred_check
      _
    $region3: #{head_forward.1} parent=1 // pred_check_branch
      %10 = sbr.rel (0) target = $region5
    $region4: #{head_forward.1} parent=1 // pred_region
      %s12 = ssub.s32 512, 512
      %13 = vsyncadd [#allocation3], %s12
      %s14 = sshll.u32 [#allocation2], 4
      %s15 = int_to_ptr.vmem [resolvable:$true] %s14
      %20 = dma.hbm_to_vmem [thread:$0]  %s0, 512, %s15, [#allocation3], 256, 256, 16
    $region5: #{head_forward.1} parent=1 // pred_fallthru
      _
    // Predicated region
    $region6: #{head_forward.1} parent=1 // pred_check
      _
    $region7: #{head_forward.1} parent=1 // pred_check_branch
      %22 = sbr.rel (0) target = $region9
    $region8: #{head_forward.1} parent=1 // pred_region
      %s24 = ssub.s32 3456, 3456
      %25 = vsyncadd [#allocation5], %s24
      %s26 = sshll.u32 [#allocation4], 4
      %s27 = int_to_ptr.vmem [resolvable:$true] %s26
      %32 = dma.hbm_to_vmem [thread:$0]  %s1, 3456, %s27, [#allocation5], 192, 192, 12
    $region9: #{head_forward.1} parent=1 // pred_fallthru
      _
    // Predicated region
    $region10: #{head_forward.1} parent=1 // pred_check
      _
    $region11: #{head_forward.1} parent=1 // pred_check_branch
      %34 = sbr.rel (0) target = $region13
    $region12: #{head_forward.1} parent=1 // pred_region
      %35 = dma.done [#allocation3], 512
    $region13: #{head_forward.1} parent=1 // pred_fallthru
      _
    // Predicated region
    $region14: #{head_forward.1} parent=1 // pred_check
      _
    $region15: #{head_forward.1} parent=1 // pred_check_branch
      %37 = sbr.rel (0) target = $region17
    $region16: #{head_forward.1} parent=1 // pred_region
      %38 = dma.done [#allocation5], 3456
    $region17: #{head_forward.1} parent=1 // pred_fallthru
      _
    %v40 = vld [vmem:[#allocation2] sm:$0xff]
    %v41 = vld [vmem:[#allocation2 + $0x8] sm:$0xff]
    %v42 = vld [vmem:[#allocation2 + $0x10] sm:$0xff]
    %v43 = vld [vmem:[#allocation2 + $0x18] sm:$0xff]
    %v44 = vpack.c.bf16 %v40, %v40
    %v45 = vpack.c.bf16 %v41, %v41
    %v46 = vpack.c.bf16 %v42, %v42
    %v47 = vpack.c.bf16 %v43, %v43
    %v52 = vunpack.c.l.b16 %v44
    %v53 = vunpack.c.l.b16 %v45
    %v54 = vunpack.c.l.b16 %v46
    %v55 = vunpack.c.l.b16 %v47
    %v56 = vld [vmem:[#allocation4] sm:$0xff]
    %v57 = vld [vmem:[#allocation4 + $0x8] sm:$0xf]
    %v58 = vld [vmem:[#allocation4 + $0xc] sm:$0xff]
    %v59 = vld [vmem:[#allocation4 + $0x14] sm:$0xf]
    %v60 = vld [vmem:[#allocation4 + $0x18] sm:$0xff]
    %v61 = vld [vmem:[#allocation4 + $0x20] sm:$0xf]
    %v62 = vld [vmem:[#allocation4 + $0x24] sm:$0xff]
    %v63 = vld [vmem:[#allocation4 + $0x2c] sm:$0xf]
    %v64 = vld [vmem:[#allocation4 + $0x30] sm:$0xff]
    %v65 = vld [vmem:[#allocation4 + $0x38] sm:$0xf]
    %v66 = vld [vmem:[#allocation4 + $0x3c] sm:$0xff]
    %v67 = vld [vmem:[#allocation4 + $0x44] sm:$0xf]
    %v68 = vld [vmem:[#allocation4 + $0x48] sm:$0xff]
    %v69 = vld [vmem:[#allocation4 + $0x50] sm:$0xf]
    %v70 = vld [vmem:[#allocation4 + $0x54] sm:$0xff]
    %v71 = vld [vmem:[#allocation4 + $0x5c] sm:$0xf]
    %v72 = vld [vmem:[#allocation4 + $0x60] sm:$0xff]
    %v73 = vld [vmem:[#allocation4 + $0x68] sm:$0xf]
    %v74 = vld [vmem:[#allocation4 + $0x6c] sm:$0xff]
    %v75 = vld [vmem:[#allocation4 + $0x74] sm:$0xf]
    %v76 = vld [vmem:[#allocation4 + $0x78] sm:$0xff]
    %v77 = vld [vmem:[#allocation4 + $0x80] sm:$0xf]
    %v78 = vld [vmem:[#allocation4 + $0x84] sm:$0xff]
    %v79 = vld [vmem:[#allocation4 + $0x8c] sm:$0xf]
    %v80 = vld [vmem:[#allocation4 + $0x90] sm:$0xff]
    %v81 = vld [vmem:[#allocation4 + $0x98] sm:$0xf]
    %v82 = vld [vmem:[#allocation4 + $0x9c] sm:$0xff]
    %v83 = vld [vmem:[#allocation4 + $0xa4] sm:$0xf]
    %v84 = vld [vmem:[#allocation4 + $0xa8] sm:$0xff]
    %v85 = vld [vmem:[#allocation4 + $0xb0] sm:$0xf]
    %v86 = vld [vmem:[#allocation4 + $0xb4] sm:$0xff]
    %v87 = vld [vmem:[#allocation4 + $0xbc] sm:$0xf]
    %v88 = vld [vmem:[#allocation4 + $0xc0] sm:$0xff]
    %v89 = vld [vmem:[#allocation4 + $0xc8] sm:$0xf]
    %v90 = vld [vmem:[#allocation4 + $0xcc] sm:$0x33]
    %v91 = vld [vmem:[#allocation4 + $0xd4] sm:$0x3]
    %v92 = vpack.c.b16 %v54, %v52
    %v93 = vpack.c.b16 %v55, %v53
    %v131 = vunpack.c.l.b16 %v56
    %v132 = vunpack.c.h.b16 %v56
    %v133 = vunpack.c.l.b16 %v57
    %v134 = vunpack.c.l.b16 %v58
    %v135 = vunpack.c.h.b16 %v58
    %v136 = vunpack.c.l.b16 %v59
    %v137 = vunpack.c.l.b16 %v60
    %v138 = vunpack.c.h.b16 %v60
    %v139 = vunpack.c.l.b16 %v61
    %v140 = vunpack.c.l.b16 %v62
    %v141 = vunpack.c.h.b16 %v62
    %v142 = vunpack.c.l.b16 %v63
    %v143 = vunpack.c.l.b16 %v64
    %v144 = vunpack.c.h.b16 %v64
    %v145 = vunpack.c.l.b16 %v65
    %v146 = vunpack.c.l.b16 %v66
    %v147 = vunpack.c.h.b16 %v66
    %v148 = vunpack.c.l.b16 %v67
    %v149 = vunpack.c.l.b16 %v68
    %v150 = vunpack.c.h.b16 %v68
    %v151 = vunpack.c.l.b16 %v69
    %v152 = vunpack.c.l.b16 %v70
    %v153 = vunpack.c.h.b16 %v70
    %v154 = vunpack.c.l.b16 %v71
    %v155 = vunpack.c.l.b16 %v72
    %v156 = vunpack.c.h.b16 %v72
    %v157 = vunpack.c.l.b16 %v73
    %v158 = vunpack.c.l.b16 %v74
    %v159 = vunpack.c.h.b16 %v74
    %v160 = vunpack.c.l.b16 %v75
    %v161 = vunpack.c.l.b16 %v76
    %v162 = vunpack.c.h.b16 %v76
    %v163 = vunpack.c.l.b16 %v77
    %v164 = vunpack.c.l.b16 %v78
    %v165 = vunpack.c.h.b16 %v78
    %v166 = vunpack.c.l.b16 %v79
    %v167 = vunpack.c.l.b16 %v80
    %v168 = vunpack.c.h.b16 %v80
    %v169 = vunpack.c.l.b16 %v81
    %v170 = vunpack.c.l.b16 %v82
    %v171 = vunpack.c.h.b16 %v82
    %v172 = vunpack.c.l.b16 %v83
    %v173 = vunpack.c.l.b16 %v84
    %v174 = vunpack.c.h.b16 %v84
    %v175 = vunpack.c.l.b16 %v85
    %v176 = vunpack.c.l.b16 %v86
    %v177 = vunpack.c.h.b16 %v86
    %v178 = vunpack.c.l.b16 %v87
    %v179 = vunpack.c.l.b16 %v88
    %v180 = vunpack.c.h.b16 %v88
    %v181 = vunpack.c.l.b16 %v89
    %v182 = vunpack.c.l.b16 %v90
    %v183 = vunpack.c.h.b16 %v90
    %v184 = vunpack.c.l.b16 %v91
    %v185 = vpack.c.b16 %v134, %v131
    %v186 = vpack.c.b16 %v135, %v132
    %v187 = vpack.c.b16 %v136, %v133
    %v188 = vpack.c.b16 %v140, %v137
    %v189 = vpack.c.b16 %v141, %v138
    %v190 = vpack.c.b16 %v142, %v139
    %v191 = vpack.c.b16 %v146, %v143
    %v192 = vpack.c.b16 %v147, %v144
    %v193 = vpack.c.b16 %v148, %v145
    %v194 = vpack.c.b16 %v152, %v149
    %v195 = vpack.c.b16 %v153, %v150
    %v196 = vpack.c.b16 %v154, %v151
    %v197 = vpack.c.b16 %v158, %v155
    %v198 = vpack.c.b16 %v159, %v156
    %v199 = vpack.c.b16 %v160, %v157
    %v200 = vpack.c.b16 %v164, %v161
    %v201 = vpack.c.b16 %v165, %v162
    %v202 = vpack.c.b16 %v166, %v163
    %v203 = vpack.c.b16 %v170, %v167
    %v204 = vpack.c.b16 %v171, %v168
    %v205 = vpack.c.b16 %v172, %v169
    %v206 = vpack.c.b16 %v176, %v173
    %v207 = vpack.c.b16 %v177, %v174
    %v208 = vpack.c.b16 %v178, %v175
    %v209 = vpack.c.b16 %v182, %v179
    %v210 = vpack.c.b16 %v183, %v180
    %v211 = vpack.c.b16 %v184, %v181
    %vm236 = vcmask 97280
    %v238 = vsel %vm236, %v93, 0
    %vm240 = vcmask 1045504
    %v242 = vsel %vm240, %v209, 0
    %v245 = vsel %vm240, %v210, 0
    %v248 = vsel %vm240, %v211, 0
    %250 = vmatprep.subr.bf16.mxu0 %v186
    %251 = vmatpush1.bf16.msra.mxu0 %v185
    %252 = vmatprep.subr.bf16.mxu0 %v189
    %253 = vmatpush1.bf16.msra.mxu0 %v188
    %254 = vmatprep.subr.bf16.mxu0 %v192
    %255 = vmatpush1.bf16.msra.mxu0 %v191
    %256 = vmatprep.subr.bf16.mxu0 %v195
    %257 = vmatpush1.bf16.msra.mxu0 %v194
    %258 = vmatprep.subr.bf16.mxu0 %v198
    %259 = vmatpush1.bf16.msra.mxu0 %v197
    %260 = vmatprep.subr.bf16.mxu0 %v201
    %261 = vmatpush1.bf16.msra.mxu0 %v200
    %262 = vmatprep.subr.bf16.mxu0 %v204
    %263 = vmatpush1.bf16.msra.mxu0 %v203
    %264 = vmatprep.subr.bf16.mxu0 %v207
    %265 = vmatpush1.bf16.msra.mxu0 %v206
    %266 = vmatprep.subr.bf16.mxu0 %v245
    %267 = vmatpush1.bf16.msra.mxu0 %v242
    %268 = vmatprep.subr.bf16.mxu0 0
    %269 = vmatpush1.bf16.msra.mxu0 0
    %270 = vmatprep.subr.bf16.mxu0 0
    %271 = vmatpush1.bf16.msra.mxu0 0
    %272 = vmatprep.subr.bf16.mxu0 0
    %273 = vmatpush1.bf16.msra.mxu0 0
    %274 = vmatprep.subr.bf16.mxu0 0
    %275 = vmatpush1.bf16.msra.mxu0 0
    %276 = vmatprep.subr.bf16.mxu0 0
    %277 = vmatpush1.bf16.msra.mxu0 0
    %278 = vmatprep.subr.bf16.mxu0 0
    %279 = vmatpush1.bf16.msra.mxu0 0
    %280 = vmatprep.subr.bf16.mxu0 0
    %281 = vmatpush1.bf16.msra.mxu0 0
    %282 = vmatprep.mubr.bf16.mxu0 %v238
    %283 = vmatmul.mubr.bf16.gmra.mrb[0].mxu0 %v92
    %v284 = vpop.f32.mrb[0].mxu0
    %v285 = vadd.f32 0.0, %v284
    %v286 = vpop.f32.mrb[0].mxu0
    %v287 = vadd.f32 0.0, %v286
    %v288 = vpop.f32.mrb[0].mxu0
    %v289 = vadd.f32 0.0, %v288
    %v290 = vpop.f32.mrb[0].mxu0
    %v291 = vadd.f32 0.0, %v290
    %292 = vdwg.mxu0
    %293 = vmatprep.subr.bf16.mxu0 0
    %294 = vmatpush1.bf16.msra.mxu0 %v187
    %295 = vmatprep.subr.bf16.mxu0 0
    %296 = vmatpush1.bf16.msra.mxu0 %v190
    %297 = vmatprep.subr.bf16.mxu0 0
    %298 = vmatpush1.bf16.msra.mxu0 %v193
    %299 = vmatprep.subr.bf16.mxu0 0
    %300 = vmatpush1.bf16.msra.mxu0 %v196
    %301 = vmatprep.subr.bf16.mxu0 0
    %302 = vmatpush1.bf16.msra.mxu0 %v199
    %303 = vmatprep.subr.bf16.mxu0 0
    %304 = vmatpush1.bf16.msra.mxu0 %v202
    %305 = vmatprep.subr.bf16.mxu0 0
    %306 = vmatpush1.bf16.msra.mxu0 %v205
    %307 = vmatprep.subr.bf16.mxu0 0
    %308 = vmatpush1.bf16.msra.mxu0 %v208
    %309 = vmatprep.subr.bf16.mxu0 0
    %310 = vmatpush1.bf16.msra.mxu0 %v248
    %311 = vmatprep.subr.bf16.mxu0 0
    %312 = vmatpush1.bf16.msra.mxu0 0
    %313 = vmatprep.subr.bf16.mxu0 0
    %314 = vmatpush1.bf16.msra.mxu0 0
    %315 = vmatprep.subr.bf16.mxu0 0
    %316 = vmatpush1.bf16.msra.mxu0 0
    %317 = vmatprep.subr.bf16.mxu0 0
    %318 = vmatpush1.bf16.msra.mxu0 0
    %319 = vmatprep.subr.bf16.mxu0 0
    %320 = vmatpush1.bf16.msra.mxu0 0
    %321 = vmatprep.subr.bf16.mxu0 0
    %322 = vmatpush1.bf16.msra.mxu0 0
    %323 = vmatprep.subr.bf16.mxu0 0
    %324 = vmatpush1.bf16.msra.mxu0 0
    %325 = vmatprep.mubr.bf16.mxu0 %v238
    %326 = vmatmul.mubr.bf16.gmra.mrb[0].mxu0 %v92
    %v327 = vpop.f32.mrb[0].mxu0
    %v328 = vadd.f32 0.0, %v327
    %v329 = vpop.f32.mrb[0].mxu0
    %v330 = vpop.f32.mrb[0].mxu0
    %v331 = vadd.f32 0.0, %v330
    %v332 = vpop.f32.mrb[0].mxu0
    %333 = vdwg.mxu0
    %v334 = vpack.c.bf16 %v285, %v285
    %v335 = vpack.c.bf16 %v289, %v289
    %v336 = vpack.c.bf16 %v287, %v287
    %v337 = vpack.c.bf16 %v291, %v291
    %v338 = vpack.c.bf16 %v328, %v328
    %v339 = vpack.c.bf16 %v331, %v331
    %340 = vmatprep.subr.bf16.mxu0 0
    %341 = vmatpush1.bf16.xpose.msra.mxu0 %v334
    %342 = vmatprep.subr.bf16.mxu0 0
    %343 = vmatpush1.bf16.xpose.msra.mxu0 0
    %344 = vmatprep.subr.bf16.mxu0 0
    %345 = vmatpush1.bf16.xpose.msra.mxu0 0
    %346 = vmatprep.subr.bf16.mxu0 0
    %347 = vmatpush1.bf16.xpose.msra.mxu0 0
    %348 = vmatprep.subr.bf16.mxu0 0
    %349 = vmatpush1.bf16.xpose.msra.mxu0 0
    %350 = vmatprep.subr.bf16.mxu0 0
    %351 = vmatpush1.bf16.xpose.msra.mxu0 0
    %352 = vmatprep.subr.bf16.mxu0 0
    %353 = vmatpush1.bf16.xpose.msra.mxu0 0
    %354 = vmatprep.subr.bf16.mxu0 0
    %355 = vmatpush1.bf16.xpose.msra.mxu0 0
    %356 = vmatprep.subr.bf16.mxu0 0
    %357 = vmatpush1.bf16.xpose.msra.mxu0 0
    %358 = vmatprep.subr.bf16.mxu0 0
    %359 = vmatpush1.bf16.xpose.msra.mxu0 0
    %360 = vmatprep.subr.bf16.mxu0 0
    %361 = vmatpush1.bf16.xpose.msra.mxu0 0
    %362 = vmatprep.subr.bf16.mxu0 0
    %363 = vmatpush1.bf16.xpose.msra.mxu0 0
    %364 = vmatprep.subr.bf16.mxu0 0
    %365 = vmatpush1.bf16.xpose.msra.mxu0 0
    %366 = vmatprep.subr.bf16.mxu0 0
    %367 = vmatpush1.bf16.xpose.msra.mxu0 0
    %368 = vmatprep.subr.bf16.mxu0 0
    %369 = vmatpush1.bf16.xpose.msra.mxu0 0
    %370 = vmatprep.subr.bf16.mxu0 0
    %371 = vmatpush1.bf16.xpose.msra.mxu0 0
    %372 = vmatprep.mubr.bf16.mxu0 0
    %373 = vmatmul.mubr.bf16.gmra.mrb[0].mxu0 %v336
    %v374 = vpop.f32.mrb[0].mxu0
    %v375 = vadd.f32 0.0, %v374
    %v376 = vpop.f32.mrb[0].mxu0
    %v377 = vpop.f32.mrb[0].mxu0
    %v378 = vpop.f32.mrb[0].mxu0
    %379 = vdwg.mxu0
    %380 = vmatprep.subr.bf16.mxu0 0
    %381 = vmatpush1.bf16.xpose.msra.mxu0 %v335
    %382 = vmatprep.subr.bf16.mxu0 0
    %383 = vmatpush1.bf16.xpose.msra.mxu0 0
    %384 = vmatprep.subr.bf16.mxu0 0
    %385 = vmatpush1.bf16.xpose.msra.mxu0 0
    %386 = vmatprep.subr.bf16.mxu0 0
    %387 = vmatpush1.bf16.xpose.msra.mxu0 0
    %388 = vmatprep.subr.bf16.mxu0 0
    %389 = vmatpush1.bf16.xpose.msra.mxu0 0
    %390 = vmatprep.subr.bf16.mxu0 0
    %391 = vmatpush1.bf16.xpose.msra.mxu0 0
    %392 = vmatprep.subr.bf16.mxu0 0
    %393 = vmatpush1.bf16.xpose.msra.mxu0 0
    %394 = vmatprep.subr.bf16.mxu0 0
    %395 = vmatpush1.bf16.xpose.msra.mxu0 0
    %396 = vmatprep.subr.bf16.mxu0 0
    %397 = vmatpush1.bf16.xpose.msra.mxu0 0
    %398 = vmatprep.subr.bf16.mxu0 0
    %399 = vmatpush1.bf16.xpose.msra.mxu0 0
    %400 = vmatprep.subr.bf16.mxu0 0
    %401 = vmatpush1.bf16.xpose.msra.mxu0 0
    %402 = vmatprep.subr.bf16.mxu0 0
    %403 = vmatpush1.bf16.xpose.msra.mxu0 0
    %404 = vmatprep.subr.bf16.mxu0 0
    %405 = vmatpush1.bf16.xpose.msra.mxu0 0
    %406 = vmatprep.subr.bf16.mxu0 0
    %407 = vmatpush1.bf16.xpose.msra.mxu0 0
    %408 = vmatprep.subr.bf16.mxu0 0
    %409 = vmatpush1.bf16.xpose.msra.mxu0 0
    %410 = vmatprep.subr.bf16.mxu0 0
    %411 = vmatpush1.bf16.xpose.msra.mxu0 0
    %412 = vmatprep.mubr.bf16.mxu0 0
    %413 = vmatmul.mubr.bf16.gmra.mrb[0].mxu0 %v337
    %v414 = vpop.f32.mrb[0].mxu0
    %v415 = vadd.f32 0.0, %v414
    %v416 = vpop.f32.mrb[0].mxu0
    %v417 = vpop.f32.mrb[0].mxu0
    %v418 = vpop.f32.mrb[0].mxu0
    %419 = vdwg.mxu0
    %v420 = vlaneseq
    %v421 = vshrl.u32 %v420, 7
    %v422 = vlaneseq
    %v423 = vand.u32 %v422, 127
    %vm424 = vcmp.le.s32.totalorder %v423, %v421
    %v425 = vsel %vm424, 1, 0
    %vm426 = vcmp.eq.s32.totalorder %v425, 1
    %v427 = vsel %vm426, %v375, -inf
    %v428 = vsel %vm426, %v415, -inf
    %vm429 = vcmask 64512
    %v430 = vsel %vm429, %v427, -inf
    %431 = vmax.xlane.f32.xlu0 %v430
    %v432 = vpop.xlane.xlu0 %431
    %v433 = vsel %vm429, %v428, -inf
    %434 = vmax.xlane.f32.xlu0 %v433
    %v435 = vpop.xlane.xlu0 %434
    %v436 = vsub.f32 %v427, %v432
    %v437 = vsub.f32 %v428, %v435
    %v438 = vmul.f32 %v436, 1.442695
    %v439 = vpow.pop %v438
    %v440 = vmul.f32 %v437, 1.442695
    %v441 = vpow.pop %v440
    %v442 = vsel %vm429, %v439, 0.0
    %443 = vadd.xlane.f32.xlu0 %v442
    %v444 = vpop.xlane.xlu0 %443
    %v445 = vsel %vm429, %v441, 0.0
    %446 = vadd.xlane.f32.xlu0 %v445
    %v447 = vpop.xlane.xlu0 %446
    %v448 = vrcp.pop %v444
    %v449 = vrcp.pop %v447
    %v450 = vmul.f32 %v439, %v448
    %v451 = vmul.f32 %v441, %v449
    %v452 = vpack.c.bf16 %v450, %v450
    %v453 = vpack.c.bf16 %v451, %v451
    %v455 = vsel %vm429, %v452, 0
    %vm457 = vcmask 1043456
    %v459 = vsel %vm457, %v338, 0
    %461 = vmatprep.subr.bf16.mxu0 0
    %462 = vmatpush1.bf16.msra.mxu0 %v459
    %463 = vmatprep.subr.bf16.mxu0 0
    %464 = vmatpush1.bf16.msra.mxu0 0
    %465 = vmatprep.subr.bf16.mxu0 0
    %466 = vmatpush1.bf16.msra.mxu0 0
    %467 = vmatprep.subr.bf16.mxu0 0
    %468 = vmatpush1.bf16.msra.mxu0 0
    %469 = vmatprep.subr.bf16.mxu0 0
    %470 = vmatpush1.bf16.msra.mxu0 0
    %471 = vmatprep.subr.bf16.mxu0 0
    %472 = vmatpush1.bf16.msra.mxu0 0
    %473 = vmatprep.subr.bf16.mxu0 0
    %474 = vmatpush1.bf16.msra.mxu0 0
    %475 = vmatprep.subr.bf16.mxu0 0
    %476 = vmatpush1.bf16.msra.mxu0 0
    %477 = vmatprep.subr.bf16.mxu0 0
    %478 = vmatpush1.bf16.msra.mxu0 0
    %479 = vmatprep.subr.bf16.mxu0 0
    %480 = vmatpush1.bf16.msra.mxu0 0
    %481 = vmatprep.subr.bf16.mxu0 0
    %482 = vmatpush1.bf16.msra.mxu0 0
    %483 = vmatprep.subr.bf16.mxu0 0
    %484 = vmatpush1.bf16.msra.mxu0 0
    %485 = vmatprep.subr.bf16.mxu0 0
    %486 = vmatpush1.bf16.msra.mxu0 0
    %487 = vmatprep.subr.bf16.mxu0 0
    %488 = vmatpush1.bf16.msra.mxu0 0
    %489 = vmatprep.subr.bf16.mxu0 0
    %490 = vmatpush1.bf16.msra.mxu0 0
    %491 = vmatprep.subr.bf16.mxu0 0
    %492 = vmatpush1.bf16.msra.mxu0 0
    %493 = vmatprep.mubr.bf16.mxu0 0
    %494 = vmatmul.mubr.bf16.gmra.mrb[0].mxu0 %v455
    %v495 = vpop.f32.mrb[0].mxu0
    %v496 = vadd.f32 0.0, %v495
    %v497 = vpop.f32.mrb[0].mxu0
    %v498 = vpop.f32.mrb[0].mxu0
    %v499 = vpop.f32.mrb[0].mxu0
    %500 = vdwg.mxu0
    %v502 = vsel %vm429, %v453, 0
    %v505 = vsel %vm457, %v339, 0
    %507 = vmatprep.subr.bf16.mxu0 0
    %508 = vmatpush1.bf16.msra.mxu0 %v505
    %509 = vmatprep.subr.bf16.mxu0 0
    %510 = vmatpush1.bf16.msra.mxu0 0
    %511 = vmatprep.subr.bf16.mxu0 0
    %512 = vmatpush1.bf16.msra.mxu0 0
    %513 = vmatprep.subr.bf16.mxu0 0
    %514 = vmatpush1.bf16.msra.mxu0 0
    %515 = vmatprep.subr.bf16.mxu0 0
    %516 = vmatpush1.bf16.msra.mxu0 0
    %517 = vmatprep.subr.bf16.mxu0 0
    %518 = vmatpush1.bf16.msra.mxu0 0
    %519 = vmatprep.subr.bf16.mxu0 0
    %520 = vmatpush1.bf16.msra.mxu0 0
    %521 = vmatprep.subr.bf16.mxu0 0
    %522 = vmatpush1.bf16.msra.mxu0 0
    %523 = vmatprep.subr.bf16.mxu0 0
    %524 = vmatpush1.bf16.msra.mxu0 0
    %525 = vmatprep.subr.bf16.mxu0 0
    %526 = vmatpush1.bf16.msra.mxu0 0
    %527 = vmatprep.subr.bf16.mxu0 0
    %528 = vmatpush1.bf16.msra.mxu0 0
    %529 = vmatprep.subr.bf16.mxu0 0
    %530 = vmatpush1.bf16.msra.mxu0 0
    %531 = vmatprep.subr.bf16.mxu0 0
    %532 = vmatpush1.bf16.msra.mxu0 0
    %533 = vmatprep.subr.bf16.mxu0 0
    %534 = vmatpush1.bf16.msra.mxu0 0
    %535 = vmatprep.subr.bf16.mxu0 0
    %536 = vmatpush1.bf16.msra.mxu0 0
    %537 = vmatprep.subr.bf16.mxu0 0
    %538 = vmatpush1.bf16.msra.mxu0 0
    %539 = vmatprep.mubr.bf16.mxu0 0
    %540 = vmatmul.mubr.bf16.gmra.mrb[0].mxu0 %v502
    %v541 = vpop.f32.mrb[0].mxu0
    %v542 = vadd.f32 0.0, %v541
    %v543 = vpop.f32.mrb[0].mxu0
    %v544 = vpop.f32.mrb[0].mxu0
    %v545 = vpop.f32.mrb[0].mxu0
    %546 = vdwg.mxu0
    %v547 = vpack.c.bf16 %v496, %v496
    %v548 = vpack.c.bf16 %v542, %v542
    %549 = vst [vmem:[%s2] sm:$0xf] %v547
    %550 = vst [vmem:[%s2 + $0x4] sm:$0xf] %v548
    // Predicated region
    $region18: #{head_forward.1} parent=1 // pred_check
      _
    $region19: #{head_forward.1} parent=1 // pred_check_branch
      %552 = sbr.rel (0) target = $region21
    $region20: #{head_forward.1} parent=1 // pred_region
      _
    $region21: #{head_forward.1} parent=1 // pred_fallthru
      _
    // Predicated region
    $region22: #{head_forward.1} parent=1 // pred_check
      _
    $region23: #{head_forward.1} parent=1 // pred_check_branch
      %554 = sbr.rel (0) target = $region25
    $region24: #{head_forward.1} parent=1 // pred_region
      _
    $region25: #{head_forward.1} parent=1 // pred_fallthru
      _
    %555 = vsyncpa [#allocation3], 1
    %556 = vsyncpa [#allocation5], 1

</llo_original>
